<compile_context>
chip_gen: v7x
topology: tpu7x:2x2x1
jax: 0.10.0
libtpu: 0.0.40
codegen_flags: <defaults>
</compile_context>

<pallas_src>
import jax
import jax.numpy as jnp
from jax.experimental import pallas as pl
from jax.experimental.pallas import tpu as pltpu


def _round_up(x, m):
    return ((x + m - 1) // m) * m


def _vmem_capacity_bytes():
    """Physical VMEM capacity; conservative (v7x-sized) fallback."""
    try:
        info = pltpu.get_tpu_info()
        cap = getattr(info, "vmem_capacity_bytes", None)
        if cap:
            return int(cap)
    except Exception:
        pass
    return 64 * 1024 * 1024  # v7x-sized; v5e/v6e have 128 MiB


def _vmem_usage_bytes(row_tile, D, h_tile):
    """Rough per-generation VMEM footprint of one pipelined grid step."""
    buf = 2                                        # default double-buffering
    x_out = 2 * buf * row_tile * D * 4             # x block + out block (f32)
    weights = buf * 2 * D * h_tile * 2             # w1 + w2 slices (bf16)
    biases = buf * (h_tile + 3 * D) * 4            # b1, alpha, beta, b2 (f32)
    normed = row_tile * D * 2                      # bf16 scratch (MXU lhs)
    inter = row_tile * h_tile * 6                  # f32 h + bf16 cast (temp)
    return x_out + weights + biases + normed + inter


def _select_tiles(rows, D, Hp, budget):
    """Pick (row_tile, h_tile): weight residency first, then big row tiles."""
    rows_cap = _round_up(rows, 8)
    h_divisors = [d for d in range(Hp, 127, -128) if Hp % d == 0]  # descending
    row_candidates = (1024, 768, 512, 384, 256, 128)

    def fits(rt, ht):
        return _vmem_usage_bytes(rt, D, ht) <= budget

    # 1) Weights fully resident (single reduction step): w1/w2 DMA'd once for
    #    the whole kernel -> HBM traffic collapses to ~x + out.
    for rt in row_candidates:
        rt = min(rt, rows_cap)
        if fits(rt, Hp):
            return rt, Hp
    # 2) Stream weight slices along the hidden ("arbitrary") axis.  Prioritise
    #    a large row tile: arithmetic intensity ~ row_tile FLOPs/byte, need
    #    >=~650 on v6e, ~320 on v7x, ~240 on v5e to leave the HBM roofline.
    for rt in row_candidates:
        rt = min(rt, rows_cap)
        for ht in h_divisors[1:]:
            if fits(rt, ht):
                return rt, ht
    # 3) Last resort: tiny tiles (still correct, just slow).
    return min(128, rows_cap), h_divisors[-1]


def _ffn_kernel(x_ref, alpha_ref, beta_ref, w1_ref, b1_ref, w2_ref, b2_ref,
                o_ref, normed_ref):
    # Grid: (row tiles [parallel], hidden-dim tiles [arbitrary / reduction]).
    # o_ref has a constant block index across axis 1 -> it is the accumulator.
    j = pl.program_id(1)

    @pl.when(j == 0)
    def _():
        # LayerNorm in f32. torch.std is unbiased (divide by D-1); eps is
        # added to sigma (not variance), which also keeps padded zero-rows
        # finite (sigma=0 -> 1/(0+eps)).
        x = x_ref[...].astype(jnp.float32)
        d = x.shape[-1]
        mu = jnp.mean(x, axis=-1, keepdims=True)
        xc = x - mu
        var_unbiased = jnp.sum(xc * xc, axis=-1, keepdims=True) / jnp.float32(d - 1)
        sigma = jnp.sqrt(var_unbiased)
        inv = pl.reciprocal(sigma + jnp.float32(1e-4), approx=True)   # EUP slot
        normed = xc * inv * alpha_ref[...] + beta_ref[...]
        normed_ref[...] = normed.astype(normed_ref.dtype)             # bf16 MXU lhs
        o_ref[...] = jnp.zeros_like(o_ref)

    # w_1 slice -> bias -> ReLU (dropout_1 = identity); bf16 x bf16 -> f32.
    h = jnp.dot(normed_ref[...], w1_ref[...], preferred_element_type=jnp.float32)
    h = jnp.maximum(h + b1_ref[...].astype(jnp.float32), 0.0)

    # w_2 slice (dropout_2 = identity); accumulate in f32 directly into o_ref.
    o_ref[...] += jnp.dot(h.astype(w2_ref.dtype), w2_ref[...],
                          preferred_element_type=jnp.float32).astype(o_ref.dtype)

    @pl.when(j == pl.num_programs(1) - 1)
    def _():
        out = o_ref[...].astype(jnp.float32) \
            + b2_ref[...].astype(jnp.float32) \
            + x_ref[...].astype(jnp.float32)        # residual (pre-norm x)
        o_ref[...] = out.astype(o_ref.dtype)


def positionwise_feed_forward(x, params):
    """x: (batch, seq_len, size) float32. params: dict of weights (f32)."""
    B, L, D = x.shape
    H = params["w1"].shape[1]
    rows = B * L

    Hp = _round_up(H, 128)
    cap = _vmem_capacity_bytes()
    fit_budget = int(cap * 0.70)          # what tile selection may consume
    vmem_limit = int(cap * 0.85)          # scoped limit, headroom for compiler

    row_tile, h_tile = _select_tiles(rows, D, Hp, fit_budget)
    # v7x has two TensorCores: make sure the "parallel" row axis has >= 2 tiles
    # (one extra grid step on single-core chips is negligible).
    if rows > 8 and _round_up(rows, row_tile) // row_tile < 2:
        row_tile = _round_up(-(-rows // 2), 8)
    padded_rows = _round_up(rows, row_tile)

    x2d = x.reshape(rows, D)
    if padded_rows != rows:
        x2d = jnp.pad(x2d, ((0, padded_rows - rows), (0, 0)))

    # bf16 MXU operands: halves weight DMA/VMEM, hits the bf16 MXU peak.
    w1 = params["w1"].astype(jnp.bfloat16)
    w2 = params["w2"].astype(jnp.bfloat16)
    b1 = params["b1"]
    if Hp != H:
        # Zero-pad the hidden dim: padded columns give relu(0 + 0) = 0 and the
        # padded w2 rows contribute 0 to the accumulation.
        w1 = jnp.pad(w1, ((0, 0), (0, Hp - H)))
        b1 = jnp.pad(b1, ((0, 0), (0, Hp - H)))
        w2 = jnp.pad(w2, ((0, Hp - H), (0, 0)))

    n_row_tiles = padded_rows // row_tile
    n_h_tiles = Hp // h_tile
    grid = (n_row_tiles, n_h_tiles)

    # Advisory cost: weights are re-streamed once per row tile when the hidden
    # dim is tiled; DMA'd once when fully resident (constant block index).
    weight_passes = n_row_tiles if n_h_tiles > 1 else 1
    flops = 4 * padded_rows * D * Hp                     # two matmuls
    bytes_accessed = (2 * padded_rows * D * 4            # x in + out
                      + weight_passes * (w1.size + w2.size) * 2
                      + (b1.size + params["b2"].size + 2 * D) * 4)
    cost = pl.CostEstimate(flops=int(flops), transcendentals=int(padded_rows),
                           bytes_accessed=int(bytes_accessed))

    out2d = pl.pallas_call(
        _ffn_kernel,
        out_shape=jax.ShapeDtypeStruct((padded_rows, D), x.dtype),
        grid_spec=pltpu.PrefetchScalarGridSpec(
            num_scalar_prefetch=0,
            grid=grid,
            in_specs=[
                pl.BlockSpec((row_tile, D), lambda i, j: (i, 0)),   # x rows
                pl.BlockSpec((1, D), lambda i, j: (0, 0)),          # alpha
                pl.BlockSpec((1, D), lambda i, j: (0, 0)),          # beta
                pl.BlockSpec((D, h_tile), lambda i, j: (0, j)),     # w1 slice
                pl.BlockSpec((1, h_tile), lambda i, j: (0, j)),     # b1 slice
                pl.BlockSpec((h_tile, D), lambda i, j: (j, 0)),     # w2 slice
                pl.BlockSpec((1, D), lambda i, j: (0, 0)),          # b2
            ],
            out_specs=pl.BlockSpec((row_tile, D), lambda i, j: (i, 0)),
            scratch_shapes=[
                pltpu.VMEM((row_tile, D), jnp.bfloat16),   # normed (MXU lhs)
            ],
        ),
        compiler_params=pltpu.CompilerParams(
            dimension_semantics=("parallel", "arbitrary"),
            vmem_limit_bytes=vmem_limit,
        ),
        cost_estimate=cost,
    )(x2d, params["alpha"], params["beta"], w1, b1, w2, params["b2"])

    return out2d[:rows].reshape(B, L, D)


def init_params(key, size, hidden_size):
    """Deterministic synthetic parameters matching nn.Linear shapes.

    PyTorch nn.Linear stores weight as (out, in) and computes x @ W.T; here we
    store the already-transposed (in, out) matrices used by the kernel.
    """
    k1, k2, k3, k4 = jax.random.split(key, 4)
    bound1 = 1.0 / jnp.sqrt(size)
    bound2 = 1.0 / jnp.sqrt(hidden_size)
    return {
        "w1": jax.random.uniform(k1, (size, hidden_size), jnp.float32,
                                 -bound1, bound1),
        "b1": jax.random.uniform(k2, (1, hidden_size), jnp.float32,
                                 -bound1, bound1),
        "w2": jax.random.uniform(k3, (hidden_size, size), jnp.float32,
                                 -bound2, bound2),
        "b2": jax.random.uniform(k4, (1, size), jnp.float32,
                                 -bound2, bound2),
        "alpha": jnp.ones((1, size), jnp.float32),   # LayerNorm gain
        "beta": jnp.zeros((1, size), jnp.float32),   # LayerNorm bias
    }


def _reference(x, p):
    """Plain-JAX f32 reference mirroring the PyTorch forward (eval mode)."""
    mu = jnp.mean(x, axis=-1, keepdims=True)
    sigma = jnp.std(x, axis=-1, keepdims=True, ddof=1)  # torch.std unbiased
    normed = (x - mu) / (sigma + 1e-4) * p["alpha"][None] + p["beta"][None]
    h = jnp.maximum(normed @ p["w1"] + p["b1"][None], 0.0)
    return h @ p["w2"] + p["b2"][None] + x


if __name__ == "__main__":
    batch, seq_len, size, hidden = 2, 8, 128, 256

    key = jax.random.PRNGKey(0)
    kx, kp = jax.random.split(key)
    x = jax.random.normal(kx, (batch, seq_len, size), jnp.float32)
    params = init_params(kp, size, hidden)

    out = positionwise_feed_forward(x, params)
    out = jax.block_until_ready(out)

    ref = _reference(x, params)
    assert out.shape == (batch, seq_len, size)
    # bf16 MXU operands + approx reciprocal vs pure-f32 reference.
    assert jnp.allclose(out, ref, atol=5e-2, rtol=5e-2), "mismatch vs reference"

    print("KERNEL_OK")
</pallas_src>

<mosaic_0001>
module attributes {stable_mosaic.version = 11 : i64} {
  func.func @_ffn_kernel(%arg0: i32, %arg1: i32, %arg2: memref<8x128xf32, #tpu.memory_space<vmem>>, %arg3: memref<1x128xf32, #tpu.memory_space<vmem>>, %arg4: memref<1x128xf32, #tpu.memory_space<vmem>>, %arg5: memref<128x256xbf16, #tpu.memory_space<vmem>>, %arg6: memref<1x256xf32, #tpu.memory_space<vmem>>, %arg7: memref<256x128xbf16, #tpu.memory_space<vmem>>, %arg8: memref<1x128xf32, #tpu.memory_space<vmem>>, %arg9: memref<8x128xf32, #tpu.memory_space<vmem>>, %arg10: memref<8x128xbf16, #tpu.memory_space<vmem>>) attributes {dimension_semantics = [#tpu.dimension_semantics<parallel>, #tpu.dimension_semantics<arbitrary>], iteration_bounds = array<i64: 2, 1>, scalar_prefetch = 0 : i64, scratch_operands = 1 : i64, tpu.core_type = #tpu.core_type<tc>, window_params = [{transform_indices = @transform_0, window_bounds = array<i64: 8, 128>}, {pipeline_mode = #tpu.pipeline_mode<synchronous>, transform_indices = @transform_1, window_bounds = array<i64: 1, 128>}, {pipeline_mode = #tpu.pipeline_mode<synchronous>, transform_indices = @transform_2, window_bounds = array<i64: 1, 128>}, {transform_indices = @transform_3, window_bounds = array<i64: 128, 256>}, {transform_indices = @transform_4, window_bounds = array<i64: 1, 256>}, {transform_indices = @transform_5, window_bounds = array<i64: 256, 128>}, {pipeline_mode = #tpu.pipeline_mode<synchronous>, transform_indices = @transform_6, window_bounds = array<i64: 1, 128>}, {transform_indices = @transform_7, window_bounds = array<i64: 8, 128>}]} {
    %c0_i32 = arith.constant 0 : i32
    %0 = arith.cmpi eq, %arg1, %c0_i32 : i32
    %1 = arith.extui %0 : i1 to i32
    %c0_i32_0 = arith.constant 0 : i32
    %2 = arith.cmpi ne, %1, %c0_i32_0 : i32
    scf.if %2 {
      %c0_16 = arith.constant 0 : index
      %c0_17 = arith.constant 0 : index
      %20 = vector.load %arg2[%c0_16, %c0_17] : memref<8x128xf32, #tpu.memory_space<vmem>>, vector<8x128xf32>
      %cst_18 = arith.constant dense<0.000000e+00> : vector<8xf32>
      %21 = vector.multi_reduction <add>, %20, %cst_18 [1] : vector<8x128xf32> to vector<8xf32>
      %22 = vector.shape_cast %21 : vector<8xf32> to vector<8x1xf32>
      %cst_19 = arith.constant 1.280000e+02 : f32
      %23 = vector.broadcast %cst_19 : f32 to vector<8x1xf32>
      %24 = arith.divf %22, %23 : vector<8x1xf32>
      %25 = vector.broadcast %24 : vector<8x1xf32> to vector<8x128xf32>
      %26 = arith.subf %20, %25 : vector<8x128xf32>
      %27 = arith.mulf %26, %26 : vector<8x128xf32>
      %cst_20 = arith.constant dense<0.000000e+00> : vector<8xf32>
      %28 = vector.multi_reduction <add>, %27, %cst_20 [1] : vector<8x128xf32> to vector<8xf32>
      %29 = vector.shape_cast %28 : vector<8xf32> to vector<8x1xf32>
      %cst_21 = arith.constant 1.270000e+02 : f32
      %30 = vector.broadcast %cst_21 : f32 to vector<8x1xf32>
      %31 = arith.divf %29, %30 : vector<8x1xf32>
      %32 = math.sqrt %31 : vector<8x1xf32>
      %cst_22 = arith.constant 9.99999974E-5 : f32
      %33 = vector.broadcast %cst_22 : f32 to vector<8x1xf32>
      %34 = arith.addf %32, %33 : vector<8x1xf32>
      %35 = tpu.reciprocal %34 {approx = true} : vector<8x1xf32> -> vector<8x1xf32>
      %36 = vector.broadcast %35 : vector<8x1xf32> to vector<8x128xf32>
      %37 = arith.mulf %26, %36 : vector<8x128xf32>
      %c0_23 = arith.constant 0 : index
      %c0_24 = arith.constant 0 : index
      %38 = vector.load %arg3[%c0_23, %c0_24] : memref<1x128xf32, #tpu.memory_space<vmem>>, vector<1x128xf32>
      %39 = vector.broadcast %38 : vector<1x128xf32> to vector<8x128xf32>
      %40 = arith.mulf %37, %39 : vector<8x128xf32>
      %c0_25 = arith.constant 0 : index
      %c0_26 = arith.constant 0 : index
      %41 = vector.load %arg4[%c0_25, %c0_26] : memref<1x128xf32, #tpu.memory_space<vmem>>, vector<1x128xf32>
      %42 = vector.broadcast %41 : vector<1x128xf32> to vector<8x128xf32>
      %43 = arith.addf %40, %42 : vector<8x128xf32>
      %44 = arith.truncf %43 : vector<8x128xf32> to vector<8x128xbf16>
      %c0_27 = arith.constant 0 : index
      %c0_28 = arith.constant 0 : index
      %45 = vector.load %arg10[%c0_27, %c0_28] : memref<8x128xbf16, #tpu.memory_space<vmem>>, vector<8x128xbf16>
      tpu.vector_store %arg10[%c0_27, %c0_28], %44 {strides = array<i32>} : memref<8x128xbf16, #tpu.memory_space<vmem>>, vector<8x128xbf16>,
      %cst_29 = arith.constant 0.000000e+00 : f32
      %46 = vector.broadcast %cst_29 : f32 to vector<8x128xf32>
      %c0_30 = arith.constant 0 : index
      %c0_31 = arith.constant 0 : index
      %47 = vector.load %arg9[%c0_30, %c0_31] : memref<8x128xf32, #tpu.memory_space<vmem>>, vector<8x128xf32>
      tpu.vector_store %arg9[%c0_30, %c0_31], %46 {strides = array<i32>} : memref<8x128xf32, #tpu.memory_space<vmem>>, vector<8x128xf32>,
    } else {
    }
    %c0 = arith.constant 0 : index
    %c0_1 = arith.constant 0 : index
    %3 = vector.load %arg10[%c0, %c0_1] : memref<8x128xbf16, #tpu.memory_space<vmem>>, vector<8x128xbf16>
    %c0_2 = arith.constant 0 : index
    %c0_3 = arith.constant 0 : index
    %4 = vector.load %arg5[%c0_2, %c0_3] : memref<128x256xbf16, #tpu.memory_space<vmem>>, vector<128x256xbf16>
    %cst = arith.constant dense<0.000000e+00> : vector<8x256xf32>
    %5 = tpu.matmul %3, %4, %cst {dimension_numbers = #tpu.dot_dimension_numbers<[1], [0], [0], [1], [0, 0, 1, 1], [], []>} : vector<8x128xbf16>, vector<128x256xbf16>, vector<8x256xf32> -> vector<8x256xf32>
    %c0_4 = arith.constant 0 : index
    %c0_5 = arith.constant 0 : index
    %6 = vector.load %arg6[%c0_4, %c0_5] : memref<1x256xf32, #tpu.memory_space<vmem>>, vector<1x256xf32>
    %7 = vector.broadcast %6 : vector<1x256xf32> to vector<8x256xf32>
    %8 = arith.addf %5, %7 : vector<8x256xf32>
    %cst_6 = arith.constant 0.000000e+00 : f32
    %9 = vector.broadcast %cst_6 : f32 to vector<8x256xf32>
    %10 = arith.maximumf %8, %9 : vector<8x256xf32>
    %c0_7 = arith.constant 0 : index
    %c0_8 = arith.constant 0 : index
    %11 = vector.load %arg9[%c0_7, %c0_8] : memref<8x128xf32, #tpu.memory_space<vmem>>, vector<8x128xf32>
    %12 = arith.truncf %10 : vector<8x256xf32> to vector<8x256xbf16>
    %c0_9 = arith.constant 0 : index
    %c0_10 = arith.constant 0 : index
    %13 = vector.load %arg7[%c0_9, %c0_10] : memref<256x128xbf16, #tpu.memory_space<vmem>>, vector<256x128xbf16>
    %cst_11 = arith.constant dense<0.000000e+00> : vector<8x128xf32>
    %14 = tpu.matmul %12, %13, %cst_11 {dimension_numbers = #tpu.dot_dimension_numbers<[1], [0], [0], [1], [0, 0, 1, 1], [], []>} : vector<8x256xbf16>, vector<256x128xbf16>, vector<8x128xf32> -> vector<8x128xf32>
    %15 = arith.addf %11, %14 : vector<8x128xf32>
    %c0_12 = arith.constant 0 : index
    %c0_13 = arith.constant 0 : index
    %16 = vector.load %arg9[%c0_12, %c0_13] : memref<8x128xf32, #tpu.memory_space<vmem>>, vector<8x128xf32>
    tpu.vector_store %arg9[%c0_12, %c0_13], %15 {strides = array<i32>} : memref<8x128xf32, #tpu.memory_space<vmem>>, vector<8x128xf32>,
    %c0_i32_14 = arith.constant 0 : i32
    %17 = arith.cmpi eq, %arg1, %c0_i32_14 : i32
    %18 = arith.extui %17 : i1 to i32
    %c0_i32_15 = arith.constant 0 : i32
    %19 = arith.cmpi ne, %18, %c0_i32_15 : i32
    scf.if %19 {
      %c0_16 = arith.constant 0 : index
      %c0_17 = arith.constant 0 : index
      %20 = vector.load %arg9[%c0_16, %c0_17] : memref<8x128xf32, #tpu.memory_space<vmem>>, vector<8x128xf32>
      %c0_18 = arith.constant 0 : index
      %c0_19 = arith.constant 0 : index
      %21 = vector.load %arg8[%c0_18, %c0_19] : memref<1x128xf32, #tpu.memory_space<vmem>>, vector<1x128xf32>
      %22 = vector.broadcast %21 : vector<1x128xf32> to vector<8x128xf32>
      %23 = arith.addf %20, %22 : vector<8x128xf32>
      %c0_20 = arith.constant 0 : index
      %c0_21 = arith.constant 0 : index
      %24 = vector.load %arg2[%c0_20, %c0_21] : memref<8x128xf32, #tpu.memory_space<vmem>>, vector<8x128xf32>
      %25 = arith.addf %23, %24 : vector<8x128xf32>
      %c0_22 = arith.constant 0 : index
      %c0_23 = arith.constant 0 : index
      %26 = vector.load %arg9[%c0_22, %c0_23] : memref<8x128xf32, #tpu.memory_space<vmem>>, vector<8x128xf32>
      tpu.vector_store %arg9[%c0_22, %c0_23], %25 {strides = array<i32>} : memref<8x128xf32, #tpu.memory_space<vmem>>, vector<8x128xf32>,
    } else {
    }
    return
  }
  func.func @transform_0(%arg0: i32, %arg1: i32) -> (i32, i32) {
    %c0_i32 = arith.constant 0 : i32
    %c0_i32_0 = arith.constant 0 : i32
    return %arg0, %c0_i32 : i32, i32
  }
  func.func @transform_1(%arg0: i32, %arg1: i32) -> (i32, i32) {
    %c0_i32 = arith.constant 0 : i32
    %c0_i32_0 = arith.constant 0 : i32
    %c0_i32_1 = arith.constant 0 : i32
    return %c0_i32, %c0_i32_0 : i32, i32
  }
  func.func @transform_2(%arg0: i32, %arg1: i32) -> (i32, i32) {
    %c0_i32 = arith.constant 0 : i32
    %c0_i32_0 = arith.constant 0 : i32
    %c0_i32_1 = arith.constant 0 : i32
    return %c0_i32, %c0_i32_0 : i32, i32
  }
  func.func @transform_3(%arg0: i32, %arg1: i32) -> (i32, i32) {
    %c0_i32 = arith.constant 0 : i32
    %c0_i32_0 = arith.constant 0 : i32
    return %c0_i32, %arg1 : i32, i32
  }
  func.func @transform_4(%arg0: i32, %arg1: i32) -> (i32, i32) {
    %c0_i32 = arith.constant 0 : i32
    %c0_i32_0 = arith.constant 0 : i32
    return %c0_i32, %arg1 : i32, i32
  }
  func.func @transform_5(%arg0: i32, %arg1: i32) -> (i32, i32) {
    %c0_i32 = arith.constant 0 : i32
    %c0_i32_0 = arith.constant 0 : i32
    return %arg1, %c0_i32 : i32, i32
  }
  func.func @transform_6(%arg0: i32, %arg1: i32) -> (i32, i32) {
    %c0_i32 = arith.constant 0 : i32
    %c0_i32_0 = arith.constant 0 : i32
    %c0_i32_1 = arith.constant 0 : i32
    return %c0_i32, %c0_i32_0 : i32, i32
  }
  func.func @transform_7(%arg0: i32, %arg1: i32) -> (i32, i32) {
    %c0_i32 = arith.constant 0 : i32
    %c0_i32_0 = arith.constant 0 : i32
    return %arg0, %c0_i32 : i32, i32
  }
}

</mosaic_0001>

<llo_original>
// kernel: tpu_custom_call.1
$region0: #{tpu_custom_call.1}
  #allocation0 [shape = 'u32[]', space=smem, size = 0x4, offset = 0x4, fixed_abs, tag = 'smem constant byte address 0x4 - core index']
  #allocation1 [shape = 'u32[144,128]{1,0:T(1,128)}', space=vmem, size = 0x12000, scoped, tag = 'internal scratch']
  #allocation2 [shape = 'bf16[8,128]{1,0:T(8,128)(2,1)}', space=vmem, size = 0x800, scoped, tag = 'scratch operand']
  %s0 = inlined_call_operand.hbm [shape: f32[16,128], index: 0, kind: input, shape index: {}]
  %s1 = inlined_call_operand.vmem [shape: f32[1,128], index: 1, kind: input, shape index: {}]
  %s2 = inlined_call_operand.vmem [shape: f32[1,128], index: 2, kind: input, shape index: {}]
  %s3 = inlined_call_operand.hbm [shape: bf16[128,256], index: 3, kind: input, shape index: {}]
  %s4 = inlined_call_operand.vmem [shape: f32[1,256], index: 4, kind: input, shape index: {}]
  %s5 = inlined_call_operand.hbm [shape: bf16[256,128], index: 5, kind: input, shape index: {}]
  %s6 = inlined_call_operand.vmem [shape: f32[1,128], index: 6, kind: input, shape index: {}]
  %s7 = inlined_call_operand.hbm [shape: f32[16,128], index: 7, kind: output, shape index: {}]
  %s8 = sld [smem:[#allocation0]]
  $region81: #{tpu_custom_call.1} parent=0
    _
  %s10 = ssub.s32 1, %s8
  %s11 = scalar_select 0, %s10, %s8
  $region1: #{tpu_custom_call.1} parent=0
    #allocation3 [shape = 'u8[8192]{0}', space=vmem, size = 0x2000, scoped, tag = 'input window, operand 0']
    #allocation4 [shape = 's32[2]{0}', space=sflag, size = 0x8, scoped, tag = 'scoped memory for tpu_custom_call.1']
    #allocation5 [shape = 's32[2]{0}', space=sflag, size = 0x8, scoped, tag = 'scoped memory for tpu_custom_call.1']
    #allocation6 [shape = 'u8[65536]{0}', space=vmem, size = 0x10000, scoped, tag = 'input window, operand 3, single buffered']
    #allocation7 [shape = 's32[1]{0}', space=sflag, size = 0x4, scoped, tag = 'scoped memory for tpu_custom_call.1']
    #allocation8 [shape = 'u8[65536]{0}', space=vmem, size = 0x10000, scoped, tag = 'input window, operand 5, single buffered']
    #allocation9 [shape = 'u8[8192]{0}', space=vmem, size = 0x2000, scoped, tag = 'output window, operand 0']
    %12 = vsyncpa [#allocation4], 0
    %s13 = scalar_lea.sflag [#allocation4], 1
    %14 = vsyncpa %s13, 0
    %15 = vsyncpa [#allocation7], 0
    %16 = vsyncpa [#allocation5], 0
    %s17 = scalar_lea.sflag [#allocation5], 1
    %18 = vsyncpa %s17, 0
    loop: start=0, step=1, limit=4
    $region2: #{tpu_custom_call.1} parent=1 // loop_pre_header
      _
    $region3: #{tpu_custom_call.1} parent=1 // loop_header
      %s20 = sphi 0, %s24
      %p21 = scmp.ge.s32.totalorder %s20, 4
      %s27 = sphi 0, %s39
      %s28 = sphi 0, %s35
      %s29 = sphi 0, %s27
      %s30 = sphi 0, %s28
      %s31 = sphi 0, %s29
      %s32 = sphi 0, %s30
      %s42 = sphi 0, %s44
      %s45 = sphi 0, %s42
      %s46 = sphi 0, %s45
      %s62 = sphi 0, %s46
      %s66 = sphi 0, %s66
      %s68 = sphi 0, %s66
      %s69 = sphi 0, %s68
      %s83 = sphi 0, %s69
      %s87 = sphi 0, %s87
      %s89 = sphi 0, %s87
      %s90 = sphi 0, %s89
      %s104 = sphi 0, %s90
      %s110 = sphi 0, %s112
      %s113 = sphi 0, %s110
      %s114 = sphi 0, %s113
      %s130 = sphi 0, %s114
      %s136 = sphi 0, %s138
      %s139 = sphi 0, %s136
      %s140 = sphi 0, %s139
      %s156 = sphi 0, %s140
      %s162 = sphi 0, %s164
      %s165 = sphi 0, %s162
      %s166 = sphi 0, %s165
      %s182 = sphi 0, %s166
      %s186 = sphi 0, %s186
      %s188 = sphi 0, %s186
      %s189 = sphi 0, %s188
      %s203 = sphi 0, %s189
      %s209 = sphi 0, %s211
      %s212 = sphi 0, %s209
      %s213 = sphi 0, %s212
      %s229 = sphi 0, %s213
    $region4: #{tpu_custom_call.1} parent=1 // loop_header_branch
      %23 = sbr.rel (%p21) target = $region8
    $region5: #{tpu_custom_call.1} parent=1 // loop_body
      %s25 = ssub.s32 %s20, 1
      %s26 = ssub.s32 %s20, 2
      %s33 = sadd.s32 1, %s28
      %p34 = scmp.ge.s32.totalorder %s33, 1
      %s35 = scalar_select %p34, 0, %s33
      %s36 = sadd.s32 1, %s27
      %s37 = scalar_select %p34, %s36, %s27
      %p38 = scmp.ge.s32.totalorder %s37, 2
      %s39 = scalar_select %p38, 0, %s37
      %s40 = ssub.s32 %s27, %s39
      %p41 = scmp.eq.s32.totalorder %s40, 0
      %s43 = sadd.s32 %s42, 1
      %s44 = scalar_select %p41, %s42, %s43
      %p47 = pneg %p41
      %p48 = scmp.eq.s32.totalorder %s20, 1
      %p49 = por %p47, %p48
      %p50 = scmp.ne.s32.totalorder %s42, %s45
      %p51 = scmp.eq.s32.totalorder %s20, 0
      %p52 = por %p50, %p51
      %p53 = scmp.ne.s32.totalorder %s42, %s45
      %p54 = scmp.eq.s32.totalorder %s25, 1
      %p55 = por %p53, %p54
      %p56 = scmp.ne.s32.totalorder %s45, %s46
      %p57 = scmp.eq.s32.totalorder %s25, 0
      %p58 = por %p56, %p57
      %p59 = scmp.ne.s32.totalorder %s45, %s46
      %p60 = scmp.eq.s32.totalorder %s26, 1
      %p61 = por %p59, %p60
      %p63 = scmp.ne.s32.totalorder %s46, %s62
      %p64 = scmp.eq.s32.totalorder %s26, 0
      %p65 = por %p63, %p64
      %s67 = sadd.s32 %s66, 1
      %p70 = scmp.eq.s32.totalorder %s20, 1
      %p71 = scmp.ne.s32.totalorder %s66, %s68
      %p72 = scmp.eq.s32.totalorder %s20, 0
      %p73 = por %p71, %p72
      %p74 = scmp.ne.s32.totalorder %s66, %s68
      %p75 = scmp.eq.s32.totalorder %s25, 1
      %p76 = por %p74, %p75
      %p77 = scmp.ne.s32.totalorder %s68, %s69
      %p78 = scmp.eq.s32.totalorder %s25, 0
      %p79 = por %p77, %p78
      %p80 = scmp.ne.s32.totalorder %s68, %s69
      %p81 = scmp.eq.s32.totalorder %s26, 1
      %p82 = por %p80, %p81
      %p84 = scmp.ne.s32.totalorder %s69, %s83
      %p85 = scmp.eq.s32.totalorder %s26, 0
      %p86 = por %p84, %p85
      %s88 = sadd.s32 %s87, 1
      %p91 = scmp.eq.s32.totalorder %s20, 1
      %p92 = scmp.ne.s32.totalorder %s87, %s89
      %p93 = scmp.eq.s32.totalorder %s20, 0
      %p94 = por %p92, %p93
      %p95 = scmp.ne.s32.totalorder %s87, %s89
      %p96 = scmp.eq.s32.totalorder %s25, 1
      %p97 = por %p95, %p96
      %p98 = scmp.ne.s32.totalorder %s89, %s90
      %p99 = scmp.eq.s32.totalorder %s25, 0
      %p100 = por %p98, %p99
      %p101 = scmp.ne.s32.totalorder %s89, %s90
      %p102 = scmp.eq.s32.totalorder %s26, 1
      %p103 = por %p101, %p102
      %p105 = scmp.ne.s32.totalorder %s90, %s104
      %p106 = scmp.eq.s32.totalorder %s26, 0
      %p107 = por %p105, %p106
      %s108 = ssub.s32 %s28, %s35
      %p109 = scmp.eq.s32.totalorder %s108, 0
      %s111 = sadd.s32 %s110, 1
      %s112 = scalar_select %p109, %s110, %s111
      %p115 = pneg %p109
      %p116 = scmp.eq.s32.totalorder %s20, 1
      %p117 = por %p115, %p116
      %p118 = scmp.ne.s32.totalorder %s110, %s113
      %p119 = scmp.eq.s32.totalorder %s20, 0
      %p120 = por %p118, %p119
      %p121 = scmp.ne.s32.totalorder %s110, %s113
      %p122 = scmp.eq.s32.totalorder %s25, 1
      %p123 = por %p121, %p122
      %p124 = scmp.ne.s32.totalorder %s113, %s114
      %p125 = scmp.eq.s32.totalorder %s25, 0
      %p126 = por %p124, %p125
      %p127 = scmp.ne.s32.totalorder %s113, %s114
      %p128 = scmp.eq.s32.totalorder %s26, 1
      %p129 = por %p127, %p128
      %p131 = scmp.ne.s32.totalorder %s114, %s130
      %p132 = scmp.eq.s32.totalorder %s26, 0
      %p133 = por %p131, %p132
      %s134 = ssub.s32 %s28, %s35
      %p135 = scmp.eq.s32.totalorder %s134, 0
      %s137 = sadd.s32 %s136, 1
      %s138 = scalar_select %p135, %s136, %s137
      %p141 = pneg %p135
      %p142 = scmp.eq.s32.totalorder %s20, 1
      %p143 = por %p141, %p142
      %p144 = scmp.ne.s32.totalorder %s136, %s139
      %p145 = scmp.eq.s32.totalorder %s20, 0
      %p146 = por %p144, %p145
      %p147 = scmp.ne.s32.totalorder %s136, %s139
      %p148 = scmp.eq.s32.totalorder %s25, 1
      %p149 = por %p147, %p148
      %p150 = scmp.ne.s32.totalorder %s139, %s140
      %p151 = scmp.eq.s32.totalorder %s25, 0
      %p152 = por %p150, %p151
      %p153 = scmp.ne.s32.totalorder %s139, %s140
      %p154 = scmp.eq.s32.totalorder %s26, 1
      %p155 = por %p153, %p154
      %p157 = scmp.ne.s32.totalorder %s140, %s156
      %p158 = scmp.eq.s32.totalorder %s26, 0
      %p159 = por %p157, %p158
      %s160 = ssub.s32 %s28, %s35
      %p161 = scmp.eq.s32.totalorder %s160, 0
      %s163 = sadd.s32 %s162, 1
      %s164 = scalar_select %p161, %s162, %s163
      %p167 = pneg %p161
      %p168 = scmp.eq.s32.totalorder %s20, 1
      %p169 = por %p167, %p168
      %p170 = scmp.ne.s32.totalorder %s162, %s165
      %p171 = scmp.eq.s32.totalorder %s20, 0
      %p172 = por %p170, %p171
      %p173 = scmp.ne.s32.totalorder %s162, %s165
      %p174 = scmp.eq.s32.totalorder %s25, 1
      %p175 = por %p173, %p174
      %p176 = scmp.ne.s32.totalorder %s165, %s166
      %p177 = scmp.eq.s32.totalorder %s25, 0
      %p178 = por %p176, %p177
      %p179 = scmp.ne.s32.totalorder %s165, %s166
      %p180 = scmp.eq.s32.totalorder %s26, 1
      %p181 = por %p179, %p180
      %p183 = scmp.ne.s32.totalorder %s166, %s182
      %p184 = scmp.eq.s32.totalorder %s26, 0
      %p185 = por %p183, %p184
      %s187 = sadd.s32 %s186, 1
      %p190 = scmp.eq.s32.totalorder %s20, 1
      %p191 = scmp.ne.s32.totalorder %s186, %s188
      %p192 = scmp.eq.s32.totalorder %s20, 0
      %p193 = por %p191, %p192
      %p194 = scmp.ne.s32.totalorder %s186, %s188
      %p195 = scmp.eq.s32.totalorder %s25, 1
      %p196 = por %p194, %p195
      %p197 = scmp.ne.s32.totalorder %s188, %s189
      %p198 = scmp.eq.s32.totalorder %s25, 0
      %p199 = por %p197, %p198
      %p200 = scmp.ne.s32.totalorder %s188, %s189
      %p201 = scmp.eq.s32.totalorder %s26, 1
      %p202 = por %p200, %p201
      %p204 = scmp.ne.s32.totalorder %s189, %s203
      %p205 = scmp.eq.s32.totalorder %s26, 0
      %p206 = por %p204, %p205
      %s207 = ssub.s32 %s27, %s39
      %p208 = scmp.eq.s32.totalorder %s207, 0
      %s210 = sadd.s32 %s209, 1
      %s211 = scalar_select %p208, %s209, %s210
      %p214 = pneg %p208
      %p215 = scmp.eq.s32.totalorder %s20, 1
      %p216 = por %p214, %p215
      %p217 = scmp.ne.s32.totalorder %s209, %s212
      %p218 = scmp.eq.s32.totalorder %s20, 0
      %p219 = por %p217, %p218
      %p220 = scmp.ne.s32.totalorder %s209, %s212
      %p221 = scmp.eq.s32.totalorder %s25, 1
      %p222 = por %p220, %p221
      %p223 = scmp.ne.s32.totalorder %s212, %s213
      %p224 = scmp.eq.s32.totalorder %s25, 0
      %p225 = por %p223, %p224
      %p226 = scmp.ne.s32.totalorder %s212, %s213
      %p227 = scmp.eq.s32.totalorder %s26, 1
      %p228 = por %p226, %p227
      %p230 = scmp.ne.s32.totalorder %s213, %s229
      %p231 = scmp.eq.s32.totalorder %s26, 0
      %p232 = por %p230, %p231
      %p233 = scmp.le.s32.totalorder 1, %s20
      %p234 = scmp.lt.s32.totalorder %s20, 3
      %p235 = pnand %p233, %p234
      %p236 = pneg %p235
      // Predicated region
      $region9: #{tpu_custom_call.1} parent=5 // pred_check
        _
      $region10: #{tpu_custom_call.1} parent=5 // pred_check_branch
        %238 = sbr.rel (%p235) target = $region12
      $region11: #{tpu_custom_call.1} parent=5 // pred_region
        %s239 = ssub.s32 %s20, 1
        // Predicated region
        $region13: #{tpu_custom_call.1} parent=11 // pred_check
          %p240 = pneg %p79
        $region14: #{tpu_custom_call.1} parent=11 // pred_check_branch
          %242 = sbr.rel (%p240) target = $region16
        $region15: #{tpu_custom_call.1} parent=11 // pred_region
          _
        $region16: #{tpu_custom_call.1} parent=11 // pred_fallthru
          _
        // Predicated region
        $region17: #{tpu_custom_call.1} parent=11 // pred_check
          %p243 = pneg %p100
        $region18: #{tpu_custom_call.1} parent=11 // pred_check_branch
          %245 = sbr.rel (%p243) target = $region20
        $region19: #{tpu_custom_call.1} parent=11 // pred_region
          _
        $region20: #{tpu_custom_call.1} parent=11 // pred_fallthru
          _
        // Predicated region
        $region21: #{tpu_custom_call.1} parent=11 // pred_check
          %p246 = pneg %p126
        $region22: #{tpu_custom_call.1} parent=11 // pred_check_branch
          %248 = sbr.rel (%p246) target = $region24
        $region23: #{tpu_custom_call.1} parent=11 // pred_region
          %s249 = smul.u32 2, %s30
          %s251 = ssub.s32 2048, 2048
          %252 = vsyncadd [#allocation7], %s251
          %s253 = smul.addr %s249, 64
          %s254 = scalar_lea.hbm %s3, %s253
          %s255 = sshll.u32 [#allocation6], 4
          %s256 = int_to_ptr.vmem [resolvable:$true] %s255
          %261 = dma.hbm_to_vmem [thread:$0]  %s254, 2048, %s256, [#allocation7], 128, 128, 8
        $region24: #{tpu_custom_call.1} parent=11 // pred_fallthru
          _
        // Predicated region
        $region25: #{tpu_custom_call.1} parent=11 // pred_check
          %p262 = pneg %p152
        $region26: #{tpu_custom_call.1} parent=11 // pred_check_branch
          %264 = sbr.rel (%p262) target = $region28
        $region27: #{tpu_custom_call.1} parent=11 // pred_region
          %s265 = smul.u32 2, %s30
          %p266 = scmp.lt.s32.totalorder %s265, 1
          %s267 = scalar_select %p266, %s265, 1
          %s268 = scalar_lea.vmem %s4, %s267
          %s269 = smul.u32 2, %s30
        $region28: #{tpu_custom_call.1} parent=11 // pred_fallthru
          _
        // Predicated region
        $region29: #{tpu_custom_call.1} parent=11 // pred_check
          %p270 = pneg %p178
        $region30: #{tpu_custom_call.1} parent=11 // pred_check_branch
          %272 = sbr.rel (%p270) target = $region32
        $region31: #{tpu_custom_call.1} parent=11 // pred_region
          %s273 = smul.u32 32, %s30
          %s275 = ssub.s32 2048, 2048
          %276 = vsyncadd [#allocation7], %s275
          %s277 = smul.addr %s273, 64
          %s278 = scalar_lea.hbm %s5, %s277
          %s279 = sshll.u32 [#allocation8], 4
          %s280 = int_to_ptr.vmem [resolvable:$true] %s279
          %285 = dma.hbm_to_vmem [thread:$0]  %s278, 2048, %s280, [#allocation7], 64, 64, 4
        $region32: #{tpu_custom_call.1} parent=11 // pred_fallthru
          _
        // Predicated region
        $region33: #{tpu_custom_call.1} parent=11 // pred_check
          %p286 = pneg %p199
        $region34: #{tpu_custom_call.1} parent=11 // pred_check_branch
          %288 = sbr.rel (%p286) target = $region36
        $region35: #{tpu_custom_call.1} parent=11 // pred_region
          _
        $region36: #{tpu_custom_call.1} parent=11 // pred_fallthru
          _
      $region12: #{tpu_custom_call.1} parent=5 // pred_fallthru
        _
      %p289 = scmp.lt.s32.totalorder %s20, 2
      // Predicated region
      $region37: #{tpu_custom_call.1} parent=5 // pred_check
        %p290 = pneg %p289
      $region38: #{tpu_custom_call.1} parent=5 // pred_check_branch
        %292 = sbr.rel (%p290) target = $region40
      $region39: #{tpu_custom_call.1} parent=5 // pred_region
        // Predicated region
        $region41: #{tpu_custom_call.1} parent=39 // pred_check
          %p293 = pneg %p52
        $region42: #{tpu_custom_call.1} parent=39 // pred_check_branch
          %295 = sbr.rel (%p293) target = $region44
        $region43: #{tpu_custom_call.1} parent=39 // pred_region
          %s296 = sand.u32 %s42, 1
          %s297 = scalar_lea.sflag [#allocation4], %s296
          %s298 = sand.u32 %s42, 1
          %s299 = smul.addr %s298, 8
          %s300 = scalar_lea.vmem [#allocation3], %s299
          %s302 = ssub.s32 128, 128
          %303 = vsyncadd %s297, %s302
          %s304 = smul.addr %s27, 128
          %s305 = scalar_lea.hbm %s0, %s304
          %s307 = sshll.u32 %s300, 4
          %s308 = int_to_ptr.vmem [resolvable:$true] %s307
          %310 = dma.hbm_to_vmem [thread:$0]  %s305, 128, %s308, %s297
        $region44: #{tpu_custom_call.1} parent=39 // pred_fallthru
          _
      $region40: #{tpu_custom_call.1} parent=5 // pred_fallthru
        _
      %p311 = scmp.le.s32.totalorder 1, %s20
      %p312 = scmp.lt.s32.totalorder %s20, 3
      %p313 = pnand %p311, %p312
      %p314 = pneg %p313
      // Predicated region
      $region45: #{tpu_custom_call.1} parent=5 // pred_check
        _
      $region46: #{tpu_custom_call.1} parent=5 // pred_check_branch
        %316 = sbr.rel (%p313) target = $region48
      $region47: #{tpu_custom_call.1} parent=5 // pred_region
        %s317 = ssub.s32 %s20, 1
        %s318 = sand.u32 %s45, 1
        %s319 = scalar_lea.sflag [#allocation4], %s318
        %s320 = sand.u32 %s45, 1
        %s321 = smul.addr %s320, 8
        %s322 = scalar_lea.vmem [#allocation3], %s321
        // Predicated region
        $region49: #{tpu_custom_call.1} parent=47 // pred_check
          %p323 = pneg %p58
        $region50: #{tpu_custom_call.1} parent=47 // pred_check_branch
          %325 = sbr.rel (%p323) target = $region52
        $region51: #{tpu_custom_call.1} parent=47 // pred_region
          %326 = dma.done %s319, 128
        $region52: #{tpu_custom_call.1} parent=47 // pred_fallthru
          _
        // Predicated region
        $region53: #{tpu_custom_call.1} parent=47 // pred_check
          %p327 = pneg %p126
        $region54: #{tpu_custom_call.1} parent=47 // pred_check_branch
          %329 = sbr.rel (%p327) target = $region56
        $region55: #{tpu_custom_call.1} parent=47 // pred_region
          %330 = dma.done [#allocation7], 2048
        $region56: #{tpu_custom_call.1} parent=47 // pred_fallthru
          _
        // Predicated region
        $region57: #{tpu_custom_call.1} parent=47 // pred_check
          %p331 = pneg %p178
        $region58: #{tpu_custom_call.1} parent=47 // pred_check_branch
          %333 = sbr.rel (%p331) target = $region60
        $region59: #{tpu_custom_call.1} parent=47 // pred_region
          %334 = dma.done [#allocation7], 2048
        $region60: #{tpu_custom_call.1} parent=47 // pred_fallthru
          _
        %s335 = sand.u32 %s45, 1
        %s336 = scalar_lea.sflag [#allocation4], %s335
        %s337 = sand.u32 %s45, 1
        %s338 = smul.addr %s337, 8
        %s339 = scalar_lea.vmem [#allocation3], %s338
        %p340 = pneg %p58
        %p341 = pneg %p55
        %p342 = pneg %p79
        %p343 = pneg %p76
        %p344 = pneg %p100
        %p345 = pneg %p97
        %p346 = pneg %p126
        %p347 = pneg %p123
        %s348 = smul.u32 2, %s30
        %p349 = scmp.lt.s32.totalorder %s348, 1
        %s350 = scalar_select %p349, %s348, 1
        %s351 = scalar_lea.vmem %s4, %s350
        %p352 = pneg %p152
        %p353 = pneg %p149
        %p354 = pneg %p178
        %p355 = pneg %p175
        %p356 = pneg %p199
        %p357 = pneg %p196
        %p358 = pneg %p225
        %p359 = pneg %p222
        %s360 = sand.u32 %s212, 1
        %s361 = scalar_lea.sflag [#allocation5], %s360
        %s362 = sand.u32 %s212, 1
        %s363 = smul.addr %s362, 8
        %s364 = scalar_lea.vmem [#allocation9], %s363
        %s365 = smul.u32 2, %s30
        %s366 = smul.u32 2, %s30
        %p367 = scmp.lt.s32.totalorder %s366, 1
        %s368 = scalar_select %p367, %s366, 1
        %s369 = scalar_lea.vmem %s4, %s368
        %s370 = smul.u32 2, %s30
        %s371 = smul.u32 32, %s30
        %p373 = scmp.eq.s32.totalorder %s30, 0
        // Predicated region
        $region61: #{tpu_custom_call.1} parent=47 // pred_check
          %p374 = pneg %p373
        $region62: #{tpu_custom_call.1} parent=47 // pred_check_branch
          %376 = sbr.rel (%p374) target = $region64
        $region63: #{tpu_custom_call.1} parent=47 // pred_region
          %v377 = vld [vmem:[%s322] sm:$0xff]
          %378 = vadd.xlane.f32.xlu0 %v377
          %v379 = vpop.xlane.xlu0 %378
          %v380 = vrcp.pop 128.0
          %v381 = vmul.f32 %v379, %v380
          %v382 = vsub.f32 %v377, %v381
          %v383 = vmul.f32 %v382, %v382
          %384 = vadd.xlane.f32.xlu0 %v383
          %v385 = vpop.xlane.xlu0 %384
          %v386 = vrcp.pop 127.0
          %v387 = vmul.f32 %v385, %v386
          %v388 = vrsqrt.pop %v387
          %v389 = vmul.f32 %v387, %v388
          %vm390 = vcmp.eq.f32.partialorder %v387, inf
          %v391 = vsel %vm390, %v387, %v389
          %vm392 = vcmp.eq.f32.partialorder %v387, 0.0
          %v393 = vand.u32 %v387, 2147483648
          %v394 = vsel %vm392, %v393, %v391
          %v395 = vadd.f32 %v394, 0.0001
          %v396 = vrcp.pop %v395
          %v397 = vmul.f32 %v382, %v396
          %v398 = vld [vmem:[%s1] sm:$0x1]
          %v400 = vlaneseq
          %v401 = vshrl.u32 %v400, 7
          %v402 = vsub.s32 0, %v401
          %v403 = vrot.slane %v398, %v402
          %v405 = vmul.f32 %v397, %v403
          %v406 = vld [vmem:[%s2] sm:$0x1]
          %v408 = vlaneseq
          %v409 = vshrl.u32 %v408, 7
          %v410 = vsub.s32 0, %v409
          %v411 = vrot.slane %v406, %v410
          %v413 = vadd.f32 %v405, %v411
          %v414 = vpack.c.bf16 %v413, %v413
          %415 = vst [vmem:[#allocation2] sm:$0xf] %v414
          %416 = vst [vmem:[%s364] sm:$0xff] 0.0
        $region64: #{tpu_custom_call.1} parent=47 // pred_fallthru
          _
        %v417 = vld [vmem:[#allocation2] sm:$0xf]
        %v418 = vld [vmem:[#allocation6] sm:$0xff]
        %v419 = vld [vmem:[#allocation6 + $0x8] sm:$0xff]
        %v420 = vld [vmem:[#allocation6 + $0x10] sm:$0xff]
        %v421 = vld [vmem:[#allocation6 + $0x18] sm:$0xff]
        %v422 = vld [vmem:[#allocation6 + $0x20] sm:$0xff]
        %v423 = vld [vmem:[#allocation6 + $0x28] sm:$0xff]
        %v424 = vld [vmem:[#allocation6 + $0x30] sm:$0xff]
        %v425 = vld [vmem:[#allocation6 + $0x38] sm:$0xff]
        %v426 = vld [vmem:[#allocation6 + $0x40] sm:$0xff]
        %v427 = vld [vmem:[#allocation6 + $0x48] sm:$0xff]
        %v428 = vld [vmem:[#allocation6 + $0x50] sm:$0xff]
        %v429 = vld [vmem:[#allocation6 + $0x58] sm:$0xff]
        %v430 = vld [vmem:[#allocation6 + $0x60] sm:$0xff]
        %v431 = vld [vmem:[#allocation6 + $0x68] sm:$0xff]
        %v432 = vld [vmem:[#allocation6 + $0x70] sm:$0xff]
        %v433 = vld [vmem:[#allocation6 + $0x78] sm:$0xff]
        %v434 = vld [vmem:[%s369] sm:$0x3]
        %v436 = vlaneseq
        %v437 = vshrl.u32 %v436, 7
        %v438 = vsub.s32 0, %v437
        %v439 = vrot.slane %v434, %v438
        %v440 = vlaneseq
        %v441 = vshrl.u32 %v440, 7
        %v442 = vsub.s32 1, %v441
        %v443 = vrot.slane %v434, %v442
        %v462 = vunpack.c.l.b16 %v418
        %v463 = vunpack.c.h.b16 %v418
        %v464 = vunpack.c.l.b16 %v419
        %v465 = vunpack.c.h.b16 %v419
        %v466 = vunpack.c.l.b16 %v420
        %v467 = vunpack.c.h.b16 %v420
        %v468 = vunpack.c.l.b16 %v421
        %v469 = vunpack.c.h.b16 %v421
        %v470 = vunpack.c.l.b16 %v422
        %v471 = vunpack.c.h.b16 %v422
        %v472 = vunpack.c.l.b16 %v423
        %v473 = vunpack.c.h.b16 %v423
        %v474 = vunpack.c.l.b16 %v424
        %v475 = vunpack.c.h.b16 %v424
        %v476 = vunpack.c.l.b16 %v425
        %v477 = vunpack.c.h.b16 %v425
        %v478 = vunpack.c.l.b16 %v426
        %v479 = vunpack.c.h.b16 %v426
        %v480 = vunpack.c.l.b16 %v427
        %v481 = vunpack.c.h.b16 %v427
        %v482 = vunpack.c.l.b16 %v428
        %v483 = vunpack.c.h.b16 %v428
        %v484 = vunpack.c.l.b16 %v429
        %v485 = vunpack.c.h.b16 %v429
        %v486 = vunpack.c.l.b16 %v430
        %v487 = vunpack.c.h.b16 %v430
        %v488 = vunpack.c.l.b16 %v431
        %v489 = vunpack.c.h.b16 %v431
        %v490 = vunpack.c.l.b16 %v432
        %v491 = vunpack.c.h.b16 %v432
        %v492 = vunpack.c.l.b16 %v433
        %v493 = vunpack.c.h.b16 %v433
        %v494 = vpack.c.b16 %v464, %v462
        %v495 = vpack.c.b16 %v465, %v463
        %v496 = vpack.c.b16 %v468, %v466
        %v497 = vpack.c.b16 %v469, %v467
        %v498 = vpack.c.b16 %v472, %v470
        %v499 = vpack.c.b16 %v473, %v471
        %v500 = vpack.c.b16 %v476, %v474
        %v501 = vpack.c.b16 %v477, %v475
        %v502 = vpack.c.b16 %v480, %v478
        %v503 = vpack.c.b16 %v481, %v479
        %v504 = vpack.c.b16 %v484, %v482
        %v505 = vpack.c.b16 %v485, %v483
        %v506 = vpack.c.b16 %v488, %v486
        %v507 = vpack.c.b16 %v489, %v487
        %v508 = vpack.c.b16 %v492, %v490
        %v509 = vpack.c.b16 %v493, %v491
        %526 = vmatprep.subr.bf16.mxu0 %v495
        %527 = vmatpush1.bf16.msra.mxu0 %v494
        %528 = vmatprep.subr.bf16.mxu0 %v497
        %529 = vmatpush1.bf16.msra.mxu0 %v496
        %530 = vmatprep.subr.bf16.mxu0 %v499
        %531 = vmatpush1.bf16.msra.mxu0 %v498
        %532 = vmatprep.subr.bf16.mxu0 %v501
        %533 = vmatpush1.bf16.msra.mxu0 %v500
        %534 = vmatprep.subr.bf16.mxu0 %v503
        %535 = vmatpush1.bf16.msra.mxu0 %v502
        %536 = vmatprep.subr.bf16.mxu0 %v505
        %537 = vmatpush1.bf16.msra.mxu0 %v504
        %538 = vmatprep.subr.bf16.mxu0 %v507
        %539 = vmatpush1.bf16.msra.mxu0 %v506
        %540 = vmatprep.subr.bf16.mxu0 %v509
        %541 = vmatpush1.bf16.msra.mxu0 %v508
        %542 = vmatprep.subr.bf16.mxu0 0
        %543 = vmatpush1.bf16.msra.mxu0 0
        %544 = vmatprep.subr.bf16.mxu0 0
        %545 = vmatpush1.bf16.msra.mxu0 0
        %546 = vmatprep.subr.bf16.mxu0 0
        %547 = vmatpush1.bf16.msra.mxu0 0
        %548 = vmatprep.subr.bf16.mxu0 0
        %549 = vmatpush1.bf16.msra.mxu0 0
        %550 = vmatprep.subr.bf16.mxu0 0
        %551 = vmatpush1.bf16.msra.mxu0 0
        %552 = vmatprep.subr.bf16.mxu0 0
        %553 = vmatpush1.bf16.msra.mxu0 0
        %554 = vmatprep.subr.bf16.mxu0 0
        %555 = vmatpush1.bf16.msra.mxu0 0
        %556 = vmatprep.subr.bf16.mxu0 0
        %557 = vmatpush1.bf16.msra.mxu0 0
        %558 = vmatprep.mubr.bf16.mxu0 0
        %559 = vmatmul.mubr.bf16.gmra.mrb[0].mxu0 %v417
        %v560 = vpop.f32.mrb[0].mxu0
        %v561 = vadd.f32 %v439, %v560
        %v562 = vpop.f32.mrb[0].mxu0
        %v563 = vadd.f32 %v443, %v562
        %v564 = vpop.f32.mrb[0].mxu0
        %v565 = vpop.f32.mrb[0].mxu0
        %566 = vdwg.mxu0
        %v567 = vmax.f32 %v561, 0.0
        %v568 = vmax.f32 %v563, 0.0
        %v569 = vld [vmem:[%s364] sm:$0xff]
        %v570 = vpack.c.bf16 %v567, %v567
        %v571 = vpack.c.bf16 %v568, %v568
        %v572 = vld [vmem:[#allocation8] sm:$0xf]
        %v573 = vld [vmem:[#allocation8 + $0x4] sm:$0xf]
        %v574 = vld [vmem:[#allocation8 + $0x8] sm:$0xf]
        %v575 = vld [vmem:[#allocation8 + $0xc] sm:$0xf]
        %v576 = vld [vmem:[#allocation8 + $0x10] sm:$0xf]
        %v577 = vld [vmem:[#allocation8 + $0x14] sm:$0xf]
        %v578 = vld [vmem:[#allocation8 + $0x18] sm:$0xf]
        %v579 = vld [vmem:[#allocation8 + $0x1c] sm:$0xf]
        %v580 = vld [vmem:[#allocation8 + $0x20] sm:$0xf]
        %v581 = vld [vmem:[#allocation8 + $0x24] sm:$0xf]
        %v582 = vld [vmem:[#allocation8 + $0x28] sm:$0xf]
        %v583 = vld [vmem:[#allocation8 + $0x2c] sm:$0xf]
        %v584 = vld [vmem:[#allocation8 + $0x30] sm:$0xf]
        %v585 = vld [vmem:[#allocation8 + $0x34] sm:$0xf]
        %v586 = vld [vmem:[#allocation8 + $0x38] sm:$0xf]
        %v587 = vld [vmem:[#allocation8 + $0x3c] sm:$0xf]
        %v588 = vld [vmem:[#allocation8 + $0x40] sm:$0xf]
        %v589 = vld [vmem:[#allocation8 + $0x44] sm:$0xf]
        %v590 = vld [vmem:[#allocation8 + $0x48] sm:$0xf]
        %v591 = vld [vmem:[#allocation8 + $0x4c] sm:$0xf]
        %v592 = vld [vmem:[#allocation8 + $0x50] sm:$0xf]
        %v593 = vld [vmem:[#allocation8 + $0x54] sm:$0xf]
        %v594 = vld [vmem:[#allocation8 + $0x58] sm:$0xf]
        %v595 = vld [vmem:[#allocation8 + $0x5c] sm:$0xf]
        %v596 = vld [vmem:[#allocation8 + $0x60] sm:$0xf]
        %v597 = vld [vmem:[#allocation8 + $0x64] sm:$0xf]
        %v598 = vld [vmem:[#allocation8 + $0x68] sm:$0xf]
        %v599 = vld [vmem:[#allocation8 + $0x6c] sm:$0xf]
        %v600 = vld [vmem:[#allocation8 + $0x70] sm:$0xf]
        %v601 = vld [vmem:[#allocation8 + $0x74] sm:$0xf]
        %v602 = vld [vmem:[#allocation8 + $0x78] sm:$0xf]
        %v603 = vld [vmem:[#allocation8 + $0x7c] sm:$0xf]
        %v636 = vunpack.c.l.b16 %v572
        %v637 = vunpack.c.l.b16 %v573
        %v638 = vunpack.c.l.b16 %v574
        %v639 = vunpack.c.l.b16 %v575
        %v640 = vunpack.c.l.b16 %v576
        %v641 = vunpack.c.l.b16 %v577
        %v642 = vunpack.c.l.b16 %v578
        %v643 = vunpack.c.l.b16 %v579
        %v644 = vunpack.c.l.b16 %v580
        %v645 = vunpack.c.l.b16 %v581
        %v646 = vunpack.c.l.b16 %v582
        %v647 = vunpack.c.l.b16 %v583
        %v648 = vunpack.c.l.b16 %v584
        %v649 = vunpack.c.l.b16 %v585
        %v650 = vunpack.c.l.b16 %v586
        %v651 = vunpack.c.l.b16 %v587
        %v652 = vunpack.c.l.b16 %v588
        %v653 = vunpack.c.l.b16 %v589
        %v654 = vunpack.c.l.b16 %v590
        %v655 = vunpack.c.l.b16 %v591
        %v656 = vunpack.c.l.b16 %v592
        %v657 = vunpack.c.l.b16 %v593
        %v658 = vunpack.c.l.b16 %v594
        %v659 = vunpack.c.l.b16 %v595
        %v660 = vunpack.c.l.b16 %v596
        %v661 = vunpack.c.l.b16 %v597
        %v662 = vunpack.c.l.b16 %v598
        %v663 = vunpack.c.l.b16 %v599
        %v664 = vunpack.c.l.b16 %v600
        %v665 = vunpack.c.l.b16 %v601
        %v666 = vunpack.c.l.b16 %v602
        %v667 = vunpack.c.l.b16 %v603
        %v668 = vpack.c.b16 %v637, %v636
        %v669 = vpack.c.b16 %v639, %v638
        %v670 = vpack.c.b16 %v641, %v640
        %v671 = vpack.c.b16 %v643, %v642
        %v672 = vpack.c.b16 %v645, %v644
        %v673 = vpack.c.b16 %v647, %v646
        %v674 = vpack.c.b16 %v649, %v648
        %v675 = vpack.c.b16 %v651, %v650
        %v676 = vpack.c.b16 %v653, %v652
        %v677 = vpack.c.b16 %v655, %v654
        %v678 = vpack.c.b16 %v657, %v656
        %v679 = vpack.c.b16 %v659, %v658
        %v680 = vpack.c.b16 %v661, %v660
        %v681 = vpack.c.b16 %v663, %v662
        %v682 = vpack.c.b16 %v665, %v664
        %v683 = vpack.c.b16 %v667, %v666
        %700 = vmatprep.subr.bf16.mxu0 0
        %701 = vmatpush1.bf16.msra.mxu0 %v668
        %702 = vmatprep.subr.bf16.mxu0 0
        %703 = vmatpush1.bf16.msra.mxu0 %v669
        %704 = vmatprep.subr.bf16.mxu0 0
        %705 = vmatpush1.bf16.msra.mxu0 %v670
        %706 = vmatprep.subr.bf16.mxu0 0
        %707 = vmatpush1.bf16.msra.mxu0 %v671
        %708 = vmatprep.subr.bf16.mxu0 0
        %709 = vmatpush1.bf16.msra.mxu0 %v672
        %710 = vmatprep.subr.bf16.mxu0 0
        %711 = vmatpush1.bf16.msra.mxu0 %v673
        %712 = vmatprep.subr.bf16.mxu0 0
        %713 = vmatpush1.bf16.msra.mxu0 %v674
        %714 = vmatprep.subr.bf16.mxu0 0
        %715 = vmatpush1.bf16.msra.mxu0 %v675
        %716 = vmatprep.subr.bf16.mxu0 0
        %717 = vmatpush1.bf16.msra.mxu0 %v676
        %718 = vmatprep.subr.bf16.mxu0 0
        %719 = vmatpush1.bf16.msra.mxu0 %v677
        %720 = vmatprep.subr.bf16.mxu0 0
        %721 = vmatpush1.bf16.msra.mxu0 %v678
        %722 = vmatprep.subr.bf16.mxu0 0
        %723 = vmatpush1.bf16.msra.mxu0 %v679
        %724 = vmatprep.subr.bf16.mxu0 0
        %725 = vmatpush1.bf16.msra.mxu0 %v680
        %726 = vmatprep.subr.bf16.mxu0 0
        %727 = vmatpush1.bf16.msra.mxu0 %v681
        %728 = vmatprep.subr.bf16.mxu0 0
        %729 = vmatpush1.bf16.msra.mxu0 %v682
        %730 = vmatprep.subr.bf16.mxu0 0
        %731 = vmatpush1.bf16.msra.mxu0 %v683
        %732 = vmatprep.mubr.bf16.mxu0 %v571
        %733 = vmatmul.mubr.bf16.gmra.mrb[0].mxu0 %v570
        %v734 = vpop.f32.mrb[0].mxu0
        %v735 = vadd.f32 0.0, %v734
        %v736 = vpop.f32.mrb[0].mxu0
        %v737 = vpop.f32.mrb[0].mxu0
        %v738 = vpop.f32.mrb[0].mxu0
        %739 = vdwg.mxu0
        %v740 = vadd.f32 %v569, %v735
        %741 = vst [vmem:[%s364] sm:$0xff] %v740
        // Predicated region
        $region65: #{tpu_custom_call.1} parent=47 // pred_check
          %p742 = pneg %p373
        $region66: #{tpu_custom_call.1} parent=47 // pred_check_branch
          %744 = sbr.rel (%p742) target = $region68
        $region67: #{tpu_custom_call.1} parent=47 // pred_region
          %v745 = vld [vmem:[%s364] sm:$0xff]
          %v746 = vld [vmem:[%s6] sm:$0x1]
          %v748 = vlaneseq
          %v749 = vshrl.u32 %v748, 7
          %v750 = vsub.s32 0, %v749
          %v751 = vrot.slane %v746, %v750
          %v753 = vadd.f32 %v745, %v751
          %v754 = vld [vmem:[%s322] sm:$0xff]
          %v755 = vadd.f32 %v753, %v754
          %756 = vst [vmem:[%s364] sm:$0xff] %v755
        $region68: #{tpu_custom_call.1} parent=47 // pred_fallthru
          _
        %s757 = sand.u32 %s212, 1
        %s758 = scalar_lea.sflag [#allocation5], %s757
        %s759 = sand.u32 %s212, 1
        %s760 = smul.addr %s759, 8
        %s761 = scalar_lea.vmem [#allocation9], %s760
        // Predicated region
        $region69: #{tpu_custom_call.1} parent=47 // pred_check
          %p762 = pneg %p222
        $region70: #{tpu_custom_call.1} parent=47 // pred_check_branch
          %764 = sbr.rel (%p762) target = $region72
        $region71: #{tpu_custom_call.1} parent=47 // pred_region
          %s766 = ssub.s32 128, 128
          %767 = vsyncadd %s758, %s766
          %s768 = smul.addr %s29, 128
          %s769 = scalar_lea.hbm %s7, %s768
          %s771 = sshll.u32 %s761, 4
          %s772 = int_to_ptr.vmem [resolvable:$true] %s771
          %774 = dma.vmem_to_hbm [thread:$0]  %s772, 128, %s769, %s758
        $region72: #{tpu_custom_call.1} parent=47 // pred_fallthru
          _
      $region48: #{tpu_custom_call.1} parent=5 // pred_fallthru
        _
      %p775 = scmp.le.s32.totalorder 2, %s20
      // Predicated region
      $region73: #{tpu_custom_call.1} parent=5 // pred_check
        %p776 = pneg %p775
      $region74: #{tpu_custom_call.1} parent=5 // pred_check_branch
        %778 = sbr.rel (%p776) target = $region76
      $region75: #{tpu_custom_call.1} parent=5 // pred_region
        %s779 = ssub.s32 %s20, 2
        // Predicated region
        $region77: #{tpu_custom_call.1} parent=75 // pred_check
          %p780 = pneg %p228
        $region78: #{tpu_custom_call.1} parent=75 // pred_check_branch
          %782 = sbr.rel (%p780) target = $region80
        $region79: #{tpu_custom_call.1} parent=75 // pred_region
          %s783 = sand.u32 %s213, 1
          %s784 = scalar_lea.sflag [#allocation5], %s783
          %s785 = sand.u32 %s213, 1
          %s786 = smul.addr %s785, 8
          %s787 = scalar_lea.vmem [#allocation9], %s786
          %788 = dma.done %s784, 128
        $region80: #{tpu_custom_call.1} parent=75 // pred_fallthru
          _
      $region76: #{tpu_custom_call.1} parent=5 // pred_fallthru
        _
    $region6: #{tpu_custom_call.1} parent=1 // loop_footer
      %s24 = sadd.s32 1, %s20
    $region7: #{tpu_custom_call.1} parent=1 // loop_footer_branch
      %19 = sbr.rel target = $region3
    $region8: #{tpu_custom_call.1} parent=1 // loop_exit
      _
    %789 = vsyncpa [#allocation4], 1
    %s790 = scalar_lea.sflag [#allocation4], 1
    %791 = vsyncpa %s790, 1
    %792 = vsyncpa [#allocation7], 1
    %793 = vsyncpa [#allocation5], 1
    %s794 = scalar_lea.sflag [#allocation5], 1
    %795 = vsyncpa %s794, 1

</llo_original>
